<compile_context>
chip_gen: v7x
topology: tpu7x:2x2x1
jax: 0.10.0
libtpu: 0.0.40
codegen_flags: <defaults>
</compile_context>

<pallas_src>
import functools

import jax
import jax.numpy as jnp
from jax import lax
from jax.experimental import pallas as pl
from jax.experimental.pallas import tpu as pltpu

LANE = 128
SUBLANE = 8
_CHUNK = SUBLANE * LANE          # 1024: alignment granularity of the 2D view
MAX_BLOCK_ROWS = 4096            # 4096 * 128 * 4 B = 2 MiB per f32 input block


def _partial_sum(x, block_rows):
    """(block_rows, LANE) -> (SUBLANE, LANE) partial sums using VPU-only adds.

    When possible, use 4 interleaved (8,128) accumulators so the adds form a
    short tree instead of one long dependent chain on a single accumulator.
    """
    if block_rows % (4 * SUBLANE) == 0:
        y = x.reshape(-1, 4, SUBLANE, LANE).sum(axis=0)   # 4 independent chains
        return y.sum(axis=0)                              # fold the 4 partials
    return x.reshape(-1, SUBLANE, LANE).sum(axis=0)


def _bbce_kernel(pred_ref, gt_ref, mask_ref, out_ref, *, total_rows,
                 needs_tail_mask):
    block_rows = pred_ref.shape[0]

    # Cast inside the kernel so bf16 inputs stream from HBM at native width.
    pred = pred_ref[...].astype(jnp.float32)
    gt = gt_ref[...].astype(jnp.float32)
    mask = mask_ref[...].astype(jnp.float32)

    pred = pred * mask
    gt = jnp.clip(gt, 0.0, 1.0)

    # PyTorch binary_cross_entropy clamps the log terms at -100.
    # TODO(synk): if v6e/v7x profiling with bf16 input streams shows the single
    # EUP binding, compute the logs in bf16 (keep clamp + accumulation in f32).
    log_p = jnp.maximum(jnp.log(pred), jnp.float32(-100.0))
    log_1mp = jnp.maximum(jnp.log(1.0 - pred), jnp.float32(-100.0))
    # -(gt*log_p + (1-gt)*log_1mp) rewritten to save a mul and the (1-gt) temp.
    loss = -(log_1mp + gt * (log_p - log_1mp))

    if needs_tail_mask:
        # Only the last block can be partial.  Mask the *results* (2 selects)
        # against a per-block scalar `remaining`; NaN/Inf from garbage OOB rows
        # cannot leak through the select, and the common aligned case pays
        # nothing (this branch is not even traced then).
        remaining = total_rows - pl.program_id(0) * block_rows
        rel_row = lax.broadcasted_iota(jnp.int32, (block_rows, LANE), 0)
        valid = rel_row < remaining
        zero = jnp.float32(0.0)
        loss = jnp.where(valid, loss, zero)
        mask = jnp.where(valid, mask, zero)

    out_ref[0, 0] = _partial_sum(loss, block_rows)
    out_ref[0, 1] = _partial_sum(mask, block_rows)


def _bce_sums_jax(pred, gt, mask):
    """Plain-JAX loss/mask partial sums for the (<1024-element) ragged tail."""
    pred = pred.astype(jnp.float32) * mask.astype(jnp.float32)
    gt = jnp.clip(gt.astype(jnp.float32), 0.0, 1.0)
    log_p = jnp.maximum(jnp.log(pred), -100.0)
    log_1mp = jnp.maximum(jnp.log(1.0 - pred), -100.0)
    loss = -(log_1mp + gt * (log_p - log_1mp))
    return jnp.sum(loss), jnp.sum(mask.astype(jnp.float32))


def balanced_bce_loss(pred, gt, mask, *, max_block_rows=MAX_BLOCK_ROWS):
    """pred, gt, mask: same-shaped (e.g. NCHW) float arrays. Returns scalar f32."""
    assert pred.shape == gt.shape == mask.shape
    assert max_block_rows % SUBLANE == 0

    n = pred.size
    p_flat = pred.reshape(-1)      # reshape of contiguous arrays: no HBM copy
    g_flat = gt.reshape(-1)
    m_flat = mask.reshape(-1)

    tail = n % _CHUNK              # < 1024 elements handled in plain JAX below
    main = n - tail

    loss_sum = jnp.float32(0.0)
    mask_sum = jnp.float32(0.0)

    if main:
        rows = main // LANE        # multiple of SUBLANE by construction

        def view(x):
            # Zero-copy in the common case (n % 1024 == 0); the rare ragged
            # case only slices the aligned prefix instead of jnp.pad-ing all
            # three full arrays.
            if tail:
                x = x[:main]
            return x.reshape(rows, LANE)

        p2, g2, m2 = view(p_flat), view(g_flat), view(m_flat)

        block_rows = min(max_block_rows, rows)   # multiple of 8, or full extent
        num_blocks = pl.cdiv(rows, block_rows)
        needs_tail_mask = (rows % block_rows) != 0

        kernel = functools.partial(
            _bbce_kernel, total_rows=rows, needs_tail_mask=needs_tail_mask)

        in_bytes = sum(x.size * x.dtype.itemsize for x in (p2, g2, m2))
        out_bytes = num_blocks * 2 * SUBLANE * LANE * 4
        cost = pl.CostEstimate(
            flops=9 * rows * LANE,
            transcendentals=2 * rows * LANE,
            bytes_accessed=in_bytes + out_bytes,
        )

        in_spec = pl.BlockSpec((block_rows, LANE), lambda i: (i, 0))
        out_spec = pl.BlockSpec((1, 2, SUBLANE, LANE), lambda i: (i, 0, 0, 0))

        parts = pl.pallas_call(
            kernel,
            out_shape=jax.ShapeDtypeStruct(
                (num_blocks, 2, SUBLANE, LANE), jnp.float32),
            grid=(num_blocks,),
            in_specs=[in_spec, in_spec, in_spec],
            out_specs=out_spec,
            compiler_params=pltpu.CompilerParams(
                # Independent per-block partials -> the stream axis is truly
                # parallel; on v7x this lets the grid shard across both TCs.
                # TODO(synk): confirm in xprof that both v7x TensorCores get
                # blocks; if not, switch to pltpu.CORE_PARALLEL and round
                # num_blocks to an even count.
                dimension_semantics=("parallel",),
                vmem_limit_bytes=48 * 1024 * 1024,
            ),
            cost_estimate=cost,
        )(p2, g2, m2)

        loss_sum = loss_sum + jnp.sum(parts[:, 0])
        mask_sum = mask_sum + jnp.sum(parts[:, 1])

    if tail:
        t_loss, t_mask = _bce_sums_jax(
            p_flat[main:], g_flat[main:], m_flat[main:])
        loss_sum = loss_sum + t_loss
        mask_sum = mask_sum + t_mask

    return loss_sum / (mask_sum + jnp.float32(1e-6))


def _reference(pred, gt, mask):
    pred = pred.astype(jnp.float32) * mask.astype(jnp.float32)
    gt = jnp.clip(gt.astype(jnp.float32), 0.0, 1.0)
    log_p = jnp.maximum(jnp.log(pred), -100.0)
    log_1mp = jnp.maximum(jnp.log(1.0 - pred), -100.0)
    loss = -(gt * log_p + (1.0 - gt) * log_1mp)
    return jnp.sum(loss) / (jnp.sum(mask.astype(jnp.float32)) + 1e-6)


if __name__ == "__main__":
    key = jax.random.PRNGKey(0)

    def make_inputs(k, shape, dtype=jnp.float32):
        kp, kg, km = jax.random.split(k, 3)
        p = jax.random.uniform(kp, shape, dtype=jnp.float32,
                               minval=1e-3, maxval=1.0 - 1e-3).astype(dtype)
        g = (jax.random.uniform(kg, shape) > 0.5).astype(dtype)
        m = (jax.random.uniform(km, shape) > 0.3).astype(dtype)
        return p, g, m

    keys = jax.random.split(key, 6)

    # 1) Main example: small NCHW probability map (zero-copy aligned path).
    pred, gt, mask = make_inputs(keys[0], (2, 4, 16, 16))
    out = jax.block_until_ready(balanced_bce_loss(pred, gt, mask))
    ref = _reference(pred, gt, mask)
    assert jnp.allclose(out, ref, rtol=1e-5, atol=1e-5), (out, ref)

    # 2) Ragged element count with an aligned prefix: kernel + JAX tail.
    p, g, m = make_inputs(keys[1], (1, 2, 33, 33))      # 2178 = 2*1024 + 130
    o = jax.block_until_ready(balanced_bce_loss(p, g, m))
    r = _reference(p, g, m)
    assert jnp.allclose(o, r, rtol=1e-5, atol=1e-5), (o, r)

    # 3) Tiny ragged input (< 1024 elements): pure-JAX tail path.
    p, g, m = make_inputs(keys[2], (1, 3, 17, 19))
    o = jax.block_until_ready(balanced_bce_loss(p, g, m))
    r = _reference(p, g, m)
    assert jnp.allclose(o, r, rtol=1e-5, atol=1e-5), (o, r)

    # 4) Multi-block grid + partial tail block, non-tree partial-sum path.
    p, g, m = make_inputs(keys[3], (1, 1, 24, 128))
    o = jax.block_until_ready(balanced_bce_loss(p, g, m, max_block_rows=16))
    r = _reference(p, g, m)
    assert jnp.allclose(o, r, rtol=1e-5, atol=1e-5), (o, r)

    # 5) Multi-block grid + partial tail block, tree partial-sum path
    #    (block_rows % 32 == 0, same code path as the default 4096-row blocks).
    p, g, m = make_inputs(keys[4], (1, 1, 48, 128))
    o = jax.block_until_ready(balanced_bce_loss(p, g, m, max_block_rows=32))
    r = _reference(p, g, m)
    assert jnp.allclose(o, r, rtol=1e-5, atol=1e-5), (o, r)

    # 6) Native bf16 streaming (cast happens inside the kernel).
    p, g, m = make_inputs(keys[5], (2, 4, 16, 16), dtype=jnp.bfloat16)
    o = jax.block_until_ready(balanced_bce_loss(p, g, m))
    r = _reference(p, g, m)
    assert jnp.allclose(o, r, rtol=1e-5, atol=1e-5), (o, r)

    print("KERNEL_OK")
</pallas_src>

<mosaic_0001>
module attributes {stable_mosaic.version = 11 : i64} {
  func.func @_bbce_kernel(%arg0: i32, %arg1: memref<16x128xf32, #tpu.memory_space<vmem>>, %arg2: memref<16x128xf32, #tpu.memory_space<vmem>>, %arg3: memref<16x128xf32, #tpu.memory_space<vmem>>, %arg4: memref<1x2x8x128xf32, #tpu.memory_space<vmem>>) attributes {dimension_semantics = [#tpu.dimension_semantics<parallel>], iteration_bounds = array<i64: 1>, scalar_prefetch = 0 : i64, scratch_operands = 0 : i64, tpu.core_type = #tpu.core_type<tc>, window_params = [{transform_indices = @transform_0, window_bounds = array<i64: 16, 128>}, {transform_indices = @transform_1, window_bounds = array<i64: 16, 128>}, {transform_indices = @transform_2, window_bounds = array<i64: 16, 128>}, {transform_indices = @transform_3, window_bounds = array<i64: 1, 2, 8, 128>}]} {
    %c0 = arith.constant 0 : index
    %c0_0 = arith.constant 0 : index
    %0 = vector.load %arg1[%c0, %c0_0] : memref<16x128xf32, #tpu.memory_space<vmem>>, vector<16x128xf32>
    %c0_1 = arith.constant 0 : index
    %c0_2 = arith.constant 0 : index
    %1 = vector.load %arg2[%c0_1, %c0_2] : memref<16x128xf32, #tpu.memory_space<vmem>>, vector<16x128xf32>
    %c0_3 = arith.constant 0 : index
    %c0_4 = arith.constant 0 : index
    %2 = vector.load %arg3[%c0_3, %c0_4] : memref<16x128xf32, #tpu.memory_space<vmem>>, vector<16x128xf32>
    %3 = arith.mulf %0, %2 : vector<16x128xf32>
    %cst = arith.constant 0.000000e+00 : f32
    %cst_5 = arith.constant 1.000000e+00 : f32
    %4 = vector.broadcast %cst : f32 to vector<16x128xf32>
    %5 = arith.maximumf %4, %1 : vector<16x128xf32>
    %6 = vector.broadcast %cst_5 : f32 to vector<16x128xf32>
    %7 = arith.minimumf %6, %5 : vector<16x128xf32>
    %8 = math.log %3 : vector<16x128xf32>
    %cst_6 = arith.constant -1.000000e+02 : f32
    %9 = vector.broadcast %cst_6 : f32 to vector<16x128xf32>
    %10 = arith.maximumf %8, %9 : vector<16x128xf32>
    %cst_7 = arith.constant 1.000000e+00 : f32
    %11 = vector.broadcast %cst_7 : f32 to vector<16x128xf32>
    %12 = arith.subf %11, %3 : vector<16x128xf32>
    %13 = math.log %12 : vector<16x128xf32>
    %cst_8 = arith.constant -1.000000e+02 : f32
    %14 = vector.broadcast %cst_8 : f32 to vector<16x128xf32>
    %15 = arith.maximumf %13, %14 : vector<16x128xf32>
    %16 = arith.subf %10, %15 : vector<16x128xf32>
    %17 = arith.mulf %7, %16 : vector<16x128xf32>
    %18 = arith.addf %15, %17 : vector<16x128xf32>
    %cst_9 = arith.constant 0.000000e+00 : f32
    %19 = vector.broadcast %cst_9 : f32 to vector<16x128xf32>
    %20 = arith.subf %19, %18 : vector<16x128xf32>
    %21 = vector.shape_cast %20 : vector<16x128xf32> to vector<2x8x128xf32>
    %cst_10 = arith.constant dense<0.000000e+00> : vector<8x128xf32>
    %22 = vector.multi_reduction <add>, %21, %cst_10 [0] : vector<2x8x128xf32> to vector<8x128xf32>
    %c0_11 = arith.constant 0 : index
    %c0_12 = arith.constant 0 : index
    %c0_13 = arith.constant 0 : index
    %c0_14 = arith.constant 0 : index
    %23 = vector.load %arg4[%c0_11, %c0_12, %c0_13, %c0_14] : memref<1x2x8x128xf32, #tpu.memory_space<vmem>>, vector<1x1x8x128xf32>
    %24 = vector.shape_cast %23 : vector<1x1x8x128xf32> to vector<8x128xf32>
    %25 = vector.shape_cast %22 : vector<8x128xf32> to vector<1x1x8x128xf32>
    tpu.vector_store %arg4[%c0_11, %c0_12, %c0_13, %c0_14], %25 {strides = array<i32>} : memref<1x2x8x128xf32, #tpu.memory_space<vmem>>, vector<1x1x8x128xf32>,
    %26 = vector.shape_cast %2 : vector<16x128xf32> to vector<2x8x128xf32>
    %cst_15 = arith.constant dense<0.000000e+00> : vector<8x128xf32>
    %27 = vector.multi_reduction <add>, %26, %cst_15 [0] : vector<2x8x128xf32> to vector<8x128xf32>
    %c0_16 = arith.constant 0 : index
    %c1 = arith.constant 1 : index
    %c0_17 = arith.constant 0 : index
    %c0_18 = arith.constant 0 : index
    %28 = vector.load %arg4[%c0_16, %c1, %c0_17, %c0_18] : memref<1x2x8x128xf32, #tpu.memory_space<vmem>>, vector<1x1x8x128xf32>
    %29 = vector.shape_cast %28 : vector<1x1x8x128xf32> to vector<8x128xf32>
    %30 = vector.shape_cast %27 : vector<8x128xf32> to vector<1x1x8x128xf32>
    tpu.vector_store %arg4[%c0_16, %c1, %c0_17, %c0_18], %30 {strides = array<i32>} : memref<1x2x8x128xf32, #tpu.memory_space<vmem>>, vector<1x1x8x128xf32>,
    return
  }
  func.func @transform_0(%arg0: i32) -> (i32, i32) {
    %c0_i32 = arith.constant 0 : i32
    %c0_i32_0 = arith.constant 0 : i32
    return %arg0, %c0_i32 : i32, i32
  }
  func.func @transform_1(%arg0: i32) -> (i32, i32) {
    %c0_i32 = arith.constant 0 : i32
    %c0_i32_0 = arith.constant 0 : i32
    return %arg0, %c0_i32 : i32, i32
  }
  func.func @transform_2(%arg0: i32) -> (i32, i32) {
    %c0_i32 = arith.constant 0 : i32
    %c0_i32_0 = arith.constant 0 : i32
    return %arg0, %c0_i32 : i32, i32
  }
  func.func @transform_3(%arg0: i32) -> (i32, i32, i32, i32) {
    %c0_i32 = arith.constant 0 : i32
    %c0_i32_0 = arith.constant 0 : i32
    %c0_i32_1 = arith.constant 0 : i32
    %c0_i32_2 = arith.constant 0 : i32
    return %arg0, %c0_i32, %c0_i32_0, %c0_i32_1 : i32, i32, i32, i32
  }
}

</mosaic_0001>

<llo_original>
// kernel: tpu_custom_call.1
$region0: #{tpu_custom_call.1}
  #allocation0 [shape = 'u32[]', space=smem, size = 0x4, offset = 0x4, fixed_abs, tag = 'smem constant byte address 0x4 - core index']
  #allocation1 [shape = 'u32[144,128]{1,0:T(1,128)}', space=vmem, size = 0x12000, scoped, tag = 'internal scratch']
  %s0 = inlined_call_operand.hbm [shape: f32[16,128], index: 0, kind: input, shape index: {}]
  %s1 = inlined_call_operand.hbm [shape: f32[16,128], index: 1, kind: input, shape index: {}]
  %s2 = inlined_call_operand.hbm [shape: f32[16,128], index: 2, kind: input, shape index: {}]
  %s3 = inlined_call_operand.hbm [shape: f32[1,2,8,128], index: 3, kind: output, shape index: {}]
  %s4 = sld [smem:[#allocation0]]
  $region34: #{tpu_custom_call.1} parent=0
    _
  %s6 = ssub.s32 1, %s4
  %s7 = scalar_select 0, %s6, %s4
  $region1: #{tpu_custom_call.1} parent=0
    #allocation2 [shape = 'u8[8192]{0}', space=vmem, size = 0x2000, scoped, tag = 'input window, operand 0, single buffered']
    #allocation3 [shape = 's32[1]{0}', space=sflag, size = 0x4, scoped, tag = 'scoped memory for tpu_custom_call.1']
    #allocation4 [shape = 's32[1]{0}', space=sflag, size = 0x4, scoped, tag = 'scoped memory for tpu_custom_call.1']
    #allocation5 [shape = 'u8[8192]{0}', space=vmem, size = 0x2000, scoped, tag = 'input window, operand 1, single buffered']
    #allocation6 [shape = 's32[1]{0}', space=sflag, size = 0x4, scoped, tag = 'scoped memory for tpu_custom_call.1']
    #allocation7 [shape = 'u8[8192]{0}', space=vmem, size = 0x2000, scoped, tag = 'input window, operand 2, single buffered']
    #allocation8 [shape = 'u8[8192]{0}', space=vmem, size = 0x2000, scoped, tag = 'output window, operand 0, single buffered']
    %8 = vsyncpa [#allocation3], 0
    %9 = vsyncpa [#allocation6], 0
    %10 = vsyncpa [#allocation4], 0
    // Predicated region
    $region2: #{tpu_custom_call.1} parent=1 // pred_check
      _
    $region3: #{tpu_custom_call.1} parent=1 // pred_check_branch
      %12 = sbr.rel (0) target = $region5
    $region4: #{tpu_custom_call.1} parent=1 // pred_region
      %s14 = ssub.s32 256, 256
      %15 = vsyncadd [#allocation3], %s14
      %s16 = sshll.u32 [#allocation2], 4
      %s17 = int_to_ptr.vmem [resolvable:$true] %s16
      %22 = dma.hbm_to_vmem [thread:$0]  %s0, 256, %s17, [#allocation3], 128, 128, 8
    $region5: #{tpu_custom_call.1} parent=1 // pred_fallthru
      _
    // Predicated region
    $region6: #{tpu_custom_call.1} parent=1 // pred_check
      _
    $region7: #{tpu_custom_call.1} parent=1 // pred_check_branch
      %24 = sbr.rel (0) target = $region9
    $region8: #{tpu_custom_call.1} parent=1 // pred_region
      %s26 = ssub.s32 256, 256
      %27 = vsyncadd [#allocation6], %s26
      %s28 = sshll.u32 [#allocation5], 4
      %s29 = int_to_ptr.vmem [resolvable:$true] %s28
      %34 = dma.hbm_to_vmem [thread:$0]  %s1, 256, %s29, [#allocation6], 128, 128, 8
    $region9: #{tpu_custom_call.1} parent=1 // pred_fallthru
      _
    // Predicated region
    $region10: #{tpu_custom_call.1} parent=1 // pred_check
      _
    $region11: #{tpu_custom_call.1} parent=1 // pred_check_branch
      %36 = sbr.rel (0) target = $region13
    $region12: #{tpu_custom_call.1} parent=1 // pred_region
      %s38 = ssub.s32 256, 256
      %39 = vsyncadd [#allocation6], %s38
      %s40 = sshll.u32 [#allocation7], 4
      %s41 = int_to_ptr.vmem [resolvable:$true] %s40
      %46 = dma.hbm_to_vmem [thread:$0]  %s2, 256, %s41, [#allocation6], 128, 128, 8
    $region13: #{tpu_custom_call.1} parent=1 // pred_fallthru
      _
    // Predicated region
    $region14: #{tpu_custom_call.1} parent=1 // pred_check
      _
    $region15: #{tpu_custom_call.1} parent=1 // pred_check_branch
      %48 = sbr.rel (0) target = $region17
    $region16: #{tpu_custom_call.1} parent=1 // pred_region
      %49 = dma.done [#allocation3], 256
    $region17: #{tpu_custom_call.1} parent=1 // pred_fallthru
      _
    // Predicated region
    $region18: #{tpu_custom_call.1} parent=1 // pred_check
      _
    $region19: #{tpu_custom_call.1} parent=1 // pred_check_branch
      %51 = sbr.rel (0) target = $region21
    $region20: #{tpu_custom_call.1} parent=1 // pred_region
      %52 = dma.done [#allocation6], 256
    $region21: #{tpu_custom_call.1} parent=1 // pred_fallthru
      _
    // Predicated region
    $region22: #{tpu_custom_call.1} parent=1 // pred_check
      _
    $region23: #{tpu_custom_call.1} parent=1 // pred_check_branch
      %54 = sbr.rel (0) target = $region25
    $region24: #{tpu_custom_call.1} parent=1 // pred_region
      %55 = dma.done [#allocation6], 256
    $region25: #{tpu_custom_call.1} parent=1 // pred_fallthru
      _
    %v56 = vld [vmem:[#allocation2] sm:$0xff]
    %v57 = vld [vmem:[#allocation2 + $0x8] sm:$0xff]
    %v58 = vld [vmem:[#allocation5] sm:$0xff]
    %v59 = vld [vmem:[#allocation5 + $0x8] sm:$0xff]
    %v60 = vld [vmem:[#allocation7] sm:$0xff]
    %v61 = vld [vmem:[#allocation7 + $0x8] sm:$0xff]
    %v62 = vmul.f32 %v56, %v60
    %v63 = vmul.f32 %v57, %v61
    %v64 = vmax.f32 %v58, 0.0
    %v65 = vmax.f32 %v59, 0.0
    %v66 = vmin.f32 %v64, 1.0
    %v67 = vmin.f32 %v65, 1.0
    %v68 = vlog2.pop %v62
    %v69 = vmul.f32 %v68, 0.6931472
    %v70 = vlog2.pop %v63
    %v71 = vmul.f32 %v70, 0.6931472
    %v72 = vmax.f32 %v69, -100.0
    %v73 = vmax.f32 %v71, -100.0
    %v74 = vsub.f32 1.0, %v62
    %v75 = vsub.f32 1.0, %v63
    %v76 = vlog2.pop %v74
    %v77 = vmul.f32 %v76, 0.6931472
    %v78 = vlog2.pop %v75
    %v79 = vmul.f32 %v78, 0.6931472
    %v80 = vmax.f32 %v77, -100.0
    %v81 = vmax.f32 %v79, -100.0
    %v82 = vsub.f32 %v72, %v80
    %v83 = vsub.f32 %v73, %v81
    %v84 = vmul.f32 %v66, %v82
    %v85 = vmul.f32 %v67, %v83
    %v86 = vadd.f32 %v80, %v84
    %v87 = vadd.f32 %v81, %v85
    %v88 = vsub.f32 0.0, %v86
    %v89 = vsub.f32 0.0, %v87
    %v90 = vadd.f32 %v88, %v89
    %91 = vst [vmem:[#allocation8] sm:$0xff] %v90
    %v92 = vadd.f32 %v60, %v61
    %s93 = scalar_lea.vmem [#allocation8], 8
    %94 = vst [vmem:[%s93] sm:$0xff] %v92
    // Predicated region
    $region26: #{tpu_custom_call.1} parent=1 // pred_check
      _
    $region27: #{tpu_custom_call.1} parent=1 // pred_check_branch
      %96 = sbr.rel (0) target = $region29
    $region28: #{tpu_custom_call.1} parent=1 // pred_region
      %s98 = ssub.s32 256, 256
      %99 = vsyncadd [#allocation4], %s98
      %s100 = sshll.u32 [#allocation8], 4
      %s101 = int_to_ptr.vmem [resolvable:$true] %s100
      %106 = dma.vmem_to_hbm [thread:$0]  %s101, 256, %s3, [#allocation4], 128, 128, 8
    $region29: #{tpu_custom_call.1} parent=1 // pred_fallthru
      _
    // Predicated region
    $region30: #{tpu_custom_call.1} parent=1 // pred_check
      _
    $region31: #{tpu_custom_call.1} parent=1 // pred_check_branch
      %108 = sbr.rel (0) target = $region33
    $region32: #{tpu_custom_call.1} parent=1 // pred_region
      %109 = dma.done [#allocation4], 256
    $region33: #{tpu_custom_call.1} parent=1 // pred_fallthru
      _
    %110 = vsyncpa [#allocation3], 1
    %111 = vsyncpa [#allocation6], 1
    %112 = vsyncpa [#allocation4], 1

</llo_original>
